<compile_context>
chip_gen: v5e
topology: v5e:2x2
jax: 0.10.0
libtpu: 0.0.40
codegen_flags: <defaults>
</compile_context>

<pallas_src>
import functools

import jax
import jax.numpy as jnp
from jax.experimental import pallas as pl
from jax.experimental.pallas import tpu as pltpu

_LANE = 128
_SUBLANE = 8


def _round_up(x, m):
    return ((x + m - 1) // m) * m


def _mask_gen_kernel(idx_ref, out_ref, *, multi_k):
    """One (TB, TL) output tile for one (<=128-wide) chunk of top-k indices.

    idx_ref : VMEM (TB, KT) int32  -- top-k indices (global positions), -1 padded.
    out_ref : VMEM (TB, TL) float32 -- output tile (resident across the k axis).
    """
    TB, TL = out_ref.shape
    KT = idx_ref.shape[-1]

    # Global lane positions covered by this tile (TL % 128 == 0 -> lane dense).
    l_off = pl.program_id(1) * TL
    col = jax.lax.broadcasted_iota(jnp.int32, (_SUBLANE, TL), 1) + l_off
    one = jnp.float32(1.0)

    if multi_k:
        # Output tile accumulates across the k grid axis: zero on first k step.
        @pl.when(pl.program_id(2) == 0)
        def _init():
            out_ref[...] = jnp.zeros_like(out_ref)

    # Strip-mine batch rows 8 sublanes at a time so the live set (acc + col)
    # stays at ~2*TL/128 vregs regardless of TB (no spills for big blocks).
    @pl.loop(0, TB // _SUBLANE)
    def _strip(s):
        r0 = pl.multiple_of(s * _SUBLANE, _SUBLANE)
        rows = pl.ds(r0, _SUBLANE)
        if multi_k:
            acc = out_ref[rows, :]
        else:
            acc = jnp.zeros((_SUBLANE, TL), out_ref.dtype)
        idx_rows = idx_ref[rows, :]                      # (8, KT) int32, one load
        # Membership test: for each index, compare + select (2 VALU ops/vreg).
        for j in range(KT):
            acc = jnp.where(col == idx_rows[:, j:j + 1], one, acc)
        out_ref[rows, :] = acc


def mask_gen(sort_index, mask_shape, top_k):
    """JAX/Pallas equivalent of MaskGen.forward(sort_index, mask_shape, top_k)."""
    B, L = int(mask_shape[0]), int(mask_shape[1])
    top_k = int(top_k)
    # TODO(synk): tensor-valued / per-row top_k is not supported (the CUDA op
    # takes a python int top_k), matching the original module.

    k_take = max(0, min(top_k, int(sort_index.shape[-1])))
    idx = sort_index[:, :k_take].astype(jnp.int32)
    if k_take == 0:                       # degenerate: all-zero mask
        idx = jnp.full((B, 1), -1, jnp.int32)
        k_take = 1

    # ---- tiling -------------------------------------------------------------
    # Lane-dense output: pad L to a multiple of 128, slice afterwards.
    L_pad = _round_up(max(L, 1), _LANE)
    TL = L_pad
    if TL > 1024:  # largest multiple of 128 that divides L_pad, capped at 1024
        TL = next(t for t in range(1024, 0, -_LANE) if L_pad % t == 0)
    # k tiling: single full-width tile if top_k <= 128, else 128-wide tiles.
    KT = k_take if k_take <= _LANE else _LANE
    K_pad = _round_up(k_take, KT)
    # Batch tile: multiple of 8, sized for ~512 KiB f32 output blocks
    # (double-buffered well under scoped-VMEM defaults on v5e/v6e/v7x).
    TB = max(_SUBLANE, min(512, ((131072 // TL) // _SUBLANE) * _SUBLANE))
    TB = min(TB, _round_up(B, _SUBLANE))
    n_b = -(-B // TB)
    TB = _round_up(-(-_round_up(B, _SUBLANE) // n_b), _SUBLANE)  # minimize pad
    B_pad = TB * n_b

    # Pad the index table; -1 never matches a (non-negative) position.
    if K_pad != k_take or B_pad != B:
        idx = jnp.pad(idx, ((0, B_pad - B), (0, K_pad - k_take)),
                      constant_values=-1)

    n_l, n_k = L_pad // TL, K_pad // KT

    kernel = functools.partial(_mask_gen_kernel, multi_k=(n_k > 1))
    out = pl.pallas_call(
        kernel,
        out_shape=jax.ShapeDtypeStruct((B_pad, L_pad), jnp.float32),
        grid_spec=pltpu.PrefetchScalarGridSpec(
            num_scalar_prefetch=0,
            grid=(n_b, n_l, n_k),                       # reduction (k) axis last
            in_specs=[pl.BlockSpec((TB, KT), lambda b, l, k: (b, k))],
            out_specs=pl.BlockSpec((TB, TL), lambda b, l, k: (b, l)),
        ),
        compiler_params=pltpu.CompilerParams(
            dimension_semantics=("parallel", "parallel", "arbitrary"),
        ),
    )(idx)

    if B_pad != B or L_pad != L:
        out = out[:B, :L]
    return out


def _reference(sort_index, mask_shape, top_k):
    B, L = mask_shape
    rows = jnp.arange(B)[:, None]
    return jnp.zeros((B, L), jnp.float32).at[
        rows, sort_index[:, :top_k]].set(1.0)


if __name__ == "__main__":
    key = jax.random.PRNGKey(0)

    # (B, L, top_k): small-row case, L-not-multiple-of-128 case, multi-k-tile case
    cases = [(2, 16, 5), (20, 200, 7), (16, 300, 150)]
    for i, (B, L, top_k) in enumerate(cases):
        k = jax.random.fold_in(key, i)
        scores = jax.random.normal(k, (B, L), dtype=jnp.float32)
        sort_index = jnp.argsort(-scores, axis=-1).astype(jnp.int32)

        mask = mask_gen(sort_index, (B, L), top_k)
        mask = jax.block_until_ready(mask)

        ref = _reference(sort_index, (B, L), top_k)
        assert mask.shape == (B, L) and mask.dtype == jnp.float32
        assert jnp.array_equal(mask, ref), (B, L, top_k)

    print("KERNEL_OK")
</pallas_src>

<mosaic_0001>
module attributes {stable_mosaic.version = 11 : i64} {
  func.func @_mask_gen_kernel(%arg0: i32, %arg1: i32, %arg2: i32, %arg3: memref<8x5xi32, #tpu.memory_space<vmem>>, %arg4: memref<8x128xf32, #tpu.memory_space<vmem>>) attributes {dimension_semantics = [#tpu.dimension_semantics<parallel>, #tpu.dimension_semantics<parallel>, #tpu.dimension_semantics<arbitrary>], iteration_bounds = array<i64: 1, 1, 1>, scalar_prefetch = 0 : i64, scratch_operands = 0 : i64, tpu.core_type = #tpu.core_type<tc>, window_params = [{transform_indices = @transform_0, window_bounds = array<i64: 8, 5>}, {transform_indices = @transform_1, window_bounds = array<i64: 8, 128>}]} {
    %c128_i32 = arith.constant 128 : i32
    %0 = arith.muli %arg1, %c128_i32 : i32
    %1 = tpu.iota {dimensions = array<i32: 1>} : vector<8x128xi32>
    %2 = vector.broadcast %0 : i32 to vector<8x128xi32>
    %3 = arith.addi %1, %2 : vector<8x128xi32>
    %cst = arith.constant 1.000000e+00 : f32
    %c0_i32 = arith.constant 0 : i32
    %c1_i32 = arith.constant 1 : i32
    %4 = arith.muli %c0_i32, %c1_i32 : i32
    %c0_i32_0 = arith.constant 0 : i32
    %5 = arith.addi %c0_i32_0, %4 : i32
    %c8_i32 = arith.constant 8 : i32
    %6 = arith.muli %5, %c8_i32 : i32
    %7 = tpu.assume_multiple %6, 8 : i32
    %cst_1 = arith.constant 0.000000e+00 : f32
    %8 = vector.broadcast %cst_1 : f32 to vector<8x128xf32>
    %9 = arith.index_cast %7 : i32 to index
    %c0 = arith.constant 0 : index
    %10 = vector.load %arg3[%9, %c0] : memref<8x5xi32, #tpu.memory_space<vmem>>, vector<8x5xi32>
    %11 = vector.extract_strided_slice %10 {offsets = [0, 0], sizes = [8, 1], strides = [1, 1]} : vector<8x5xi32> to vector<8x1xi32>
    %12 = vector.broadcast %11 : vector<8x1xi32> to vector<8x128xi32>
    %13 = arith.cmpi eq, %3, %12 : vector<8x128xi32>
    %14 = vector.broadcast %cst : f32 to vector<8x128xf32>
    %15 = arith.select %13, %14, %8 : vector<8x128xi1>, vector<8x128xf32>
    %16 = vector.extract_strided_slice %10 {offsets = [0, 1], sizes = [8, 1], strides = [1, 1]} : vector<8x5xi32> to vector<8x1xi32>
    %17 = vector.broadcast %16 : vector<8x1xi32> to vector<8x128xi32>
    %18 = arith.cmpi eq, %3, %17 : vector<8x128xi32>
    %19 = vector.broadcast %cst : f32 to vector<8x128xf32>
    %20 = arith.select %18, %19, %15 : vector<8x128xi1>, vector<8x128xf32>
    %21 = vector.extract_strided_slice %10 {offsets = [0, 2], sizes = [8, 1], strides = [1, 1]} : vector<8x5xi32> to vector<8x1xi32>
    %22 = vector.broadcast %21 : vector<8x1xi32> to vector<8x128xi32>
    %23 = arith.cmpi eq, %3, %22 : vector<8x128xi32>
    %24 = vector.broadcast %cst : f32 to vector<8x128xf32>
    %25 = arith.select %23, %24, %20 : vector<8x128xi1>, vector<8x128xf32>
    %26 = vector.extract_strided_slice %10 {offsets = [0, 3], sizes = [8, 1], strides = [1, 1]} : vector<8x5xi32> to vector<8x1xi32>
    %27 = vector.broadcast %26 : vector<8x1xi32> to vector<8x128xi32>
    %28 = arith.cmpi eq, %3, %27 : vector<8x128xi32>
    %29 = vector.broadcast %cst : f32 to vector<8x128xf32>
    %30 = arith.select %28, %29, %25 : vector<8x128xi1>, vector<8x128xf32>
    %31 = vector.extract_strided_slice %10 {offsets = [0, 4], sizes = [8, 1], strides = [1, 1]} : vector<8x5xi32> to vector<8x1xi32>
    %32 = vector.broadcast %31 : vector<8x1xi32> to vector<8x128xi32>
    %33 = arith.cmpi eq, %3, %32 : vector<8x128xi32>
    %34 = vector.broadcast %cst : f32 to vector<8x128xf32>
    %35 = arith.select %33, %34, %30 : vector<8x128xi1>, vector<8x128xf32>
    %36 = arith.index_cast %7 : i32 to index
    %c0_2 = arith.constant 0 : index
    %37 = vector.load %arg4[%36, %c0_2] : memref<8x128xf32, #tpu.memory_space<vmem>>, vector<8x128xf32>
    tpu.vector_store %arg4[%36, %c0_2], %35 {strides = array<i32>} : memref<8x128xf32, #tpu.memory_space<vmem>>, vector<8x128xf32>,
    %c1_i32_3 = arith.constant 1 : i32
    return
  }
  func.func @transform_0(%arg0: i32, %arg1: i32, %arg2: i32) -> (i32, i32) {
    %c0_i32 = arith.constant 0 : i32
    return %arg0, %arg2 : i32, i32
  }
  func.func @transform_1(%arg0: i32, %arg1: i32, %arg2: i32) -> (i32, i32) {
    %c0_i32 = arith.constant 0 : i32
    return %arg0, %arg1 : i32, i32
  }
}

</mosaic_0001>

<llo_original>
// kernel: tpu_custom_call.1
$region0: #{tpu_custom_call.1}
  #allocation0 [shape = 'u32[]', space=smem, size = 0x4, offset = 0x4, fixed_abs, tag = 'smem constant byte address 0x4 - core index']
  #allocation1 [shape = 'u32[72,128]{1,0:T(1,128)}', space=vmem, size = 0x9000, scoped, tag = 'internal scratch']
  %s0 = inlined_call_operand.hbm [shape: s32[8,5], index: 0, kind: input, shape index: {}]
  %s1 = inlined_call_operand.hbm [shape: f32[8,128], index: 1, kind: output, shape index: {}]
  %s2 = sld [smem:[#allocation0]]
  $region18: #{tpu_custom_call.1} parent=0
    _
  %s4 = ssub.s32 1, %s2
  %s5 = scalar_select 0, %s4, %s2
  $region1: #{tpu_custom_call.1} parent=0
    #allocation2 [shape = 'u8[4096]{0}', space=vmem, size = 0x1000, scoped, tag = 'input window, operand 0, single buffered']
    #allocation3 [shape = 's32[1]{0}', space=sflag, size = 0x4, scoped, tag = 'scoped memory for tpu_custom_call.1']
    #allocation4 [shape = 's32[1]{0}', space=sflag, size = 0x4, scoped, tag = 'scoped memory for tpu_custom_call.1']
    #allocation5 [shape = 'u8[4096]{0}', space=vmem, size = 0x1000, scoped, tag = 'output window, operand 0, single buffered']
    %6 = vsyncpa [#allocation3], 0
    %7 = vsyncpa [#allocation4], 0
    // Predicated region
    $region2: #{tpu_custom_call.1} parent=1 // pred_check
      _
    $region3: #{tpu_custom_call.1} parent=1 // pred_check_branch
      %9 = sbr.rel (0) target = $region5
    $region4: #{tpu_custom_call.1} parent=1 // pred_region
      %11 = vsyncadd [#allocation3], 0
      %s13 = sshll.u32 %s0, 4
      %s14 = int_to_ptr.hbm [resolvable:$true] %s13
      %s15 = sshll.u32 [#allocation2], 4
      %s16 = int_to_ptr.vmem [resolvable:$true] %s15
      %18 = dma.hbm_to_vmem [thread:$0]  %s14, 128, %s16, [#allocation3]
    $region5: #{tpu_custom_call.1} parent=1 // pred_fallthru
      _
    // Predicated region
    $region6: #{tpu_custom_call.1} parent=1 // pred_check
      _
    $region7: #{tpu_custom_call.1} parent=1 // pred_check_branch
      %20 = sbr.rel (0) target = $region9
    $region8: #{tpu_custom_call.1} parent=1 // pred_region
      %22 = dma.done [#allocation3], 128
    $region9: #{tpu_custom_call.1} parent=1 // pred_fallthru
      _
    %s23 = smul.u32 0, 128
    %v24 = vlaneseq
    %v25 = vand.u32 %v24, 127
    %v26 = vstv %s23
    %v27 = vadd.s32 %v25, %v26
    %v28 = vld [vmem:[#allocation2] sm:$0xff]
    %29 = vset.pattern.permute.xlu0 0
    %30 = vperm.xlu0 %29, %v28
    %v31 = vpop.permute.xlu0 %30
    %vm32 = vcmp.eq.s32.totalorder %v27, %v31
    %v33 = vsel %vm32, 1.0, 0.0
    %34 = vset.pattern.permute.xlu0 1
    %35 = vperm.xlu0 %34, %v28
    %v36 = vpop.permute.xlu0 %35
    %vm37 = vcmp.eq.s32.totalorder %v27, %v36
    %v38 = vsel %vm37, 1.0, %v33
    %39 = vset.pattern.permute.xlu0 2
    %40 = vperm.xlu0 %39, %v28
    %v41 = vpop.permute.xlu0 %40
    %vm42 = vcmp.eq.s32.totalorder %v27, %v41
    %v43 = vsel %vm42, 1.0, %v38
    %44 = vset.pattern.permute.xlu0 3
    %45 = vperm.xlu0 %44, %v28
    %v46 = vpop.permute.xlu0 %45
    %vm47 = vcmp.eq.s32.totalorder %v27, %v46
    %v48 = vsel %vm47, 1.0, %v43
    %49 = vset.pattern.permute.xlu0 4
    %50 = vperm.xlu0 %49, %v28
    %v51 = vpop.permute.xlu0 %50
    %vm52 = vcmp.eq.s32.totalorder %v27, %v51
    %v53 = vsel %vm52, 1.0, %v48
    %54 = vst [vmem:[#allocation5] sm:$0xff] %v53
    // Predicated region
    $region10: #{tpu_custom_call.1} parent=1 // pred_check
      _
    $region11: #{tpu_custom_call.1} parent=1 // pred_check_branch
      %56 = sbr.rel (0) target = $region13
    $region12: #{tpu_custom_call.1} parent=1 // pred_region
      %58 = vsyncadd [#allocation4], 0
      %s60 = sshll.u32 [#allocation5], 4
      %s61 = int_to_ptr.vmem [resolvable:$true] %s60
      %s62 = sshll.u32 %s1, 4
      %s63 = int_to_ptr.hbm [resolvable:$true] %s62
      %65 = dma.vmem_to_hbm [thread:$0]  %s61, 128, %s63, [#allocation4]
    $region13: #{tpu_custom_call.1} parent=1 // pred_fallthru
      _
    // Predicated region
    $region14: #{tpu_custom_call.1} parent=1 // pred_check
      _
    $region15: #{tpu_custom_call.1} parent=1 // pred_check_branch
      %67 = sbr.rel (0) target = $region17
    $region16: #{tpu_custom_call.1} parent=1 // pred_region
      %69 = dma.done [#allocation4], 128
    $region17: #{tpu_custom_call.1} parent=1 // pred_fallthru
      _
    %70 = vsyncpa [#allocation3], 1
    %71 = vsyncpa [#allocation4], 1

</llo_original>
